<compile_context>
chip_gen: v7x
topology: tpu7x:2x2x1
jax: 0.10.0
libtpu: 0.0.40
codegen_flags: <defaults>
</compile_context>

<pallas_src>
import functools

import jax
import jax.numpy as jnp
from jax.experimental import pallas as pl
from jax.experimental.pallas import tpu as pltpu


# ------------------------------ kernels ------------------------------------ #


def _qkv_projection_kernel(x_ref, w3_ref, b3_ref, q_ref, k_ref, v_ref,
                           acc_ref, *, embed_dim):
    """One (M-tile, E-tile) step of the fused Q/K/V projection.

    The weight arrives pre-transposed/fused to (tk, 3E) and already in
    compute_dtype, with the 1/sqrt(E) scale folded into the Q columns.  The
    E (contraction) grid axis accumulates into an f32 VMEM scratch; bias add
    and the q/k/v split happen once, on the last K step.
    """
    k_step = pl.program_id(1)

    @pl.when(k_step == 0)
    def _():
        acc_ref[...] = jnp.zeros_like(acc_ref)

    acc_ref[...] += jnp.dot(x_ref[...], w3_ref[...],
                            preferred_element_type=jnp.float32)

    @pl.when(k_step == pl.num_programs(1) - 1)
    def _():
        e = embed_dim
        qkv = acc_ref[...] + b3_ref[...]          # bias add in f32
        q_ref[...] = qkv[:, :e].astype(q_ref.dtype)
        k_ref[...] = qkv[:, e:2 * e].astype(k_ref.dtype)
        v_ref[...] = qkv[:, 2 * e:].astype(v_ref.dtype)


def _attention_kernel(q_ref, k_ref, v_ref, out_ref, *attn_refs, compute_dtype):
    """One (batch, q-tile) step: scores -> softmax -> attn @ V.

    The 1/sqrt(E) scale is already folded into Q.  Scores contract the last
    dims of Q and K via dot_general (no transpose), softmax is max-subtracted
    f32 with an EUP approx reciprocal, and the single compute_dtype cast of
    the attention weights feeds both the PV matmul and the (optional) store.
    """
    q = q_ref[0]                                             # (tq, E)
    k = k_ref[0]                                             # (S,  E)
    v = v_ref[0]                                             # (S,  E)

    scores = jax.lax.dot_general(
        q, k, dimension_numbers=(((1,), (1,)), ((), ())),
        preferred_element_type=jnp.float32)                  # (tq, S)

    m = jnp.max(scores, axis=-1, keepdims=True)
    e = jnp.exp(scores - m)
    denom = jnp.sum(e, axis=-1, keepdims=True)
    attn = (e * pl.reciprocal(denom, approx=True)).astype(compute_dtype)

    # TODO(synk): nn.Dropout on attn_weights is a training-time op; in eval
    # mode it is the identity, which is what we implement here.

    out = jnp.dot(attn, v, preferred_element_type=jnp.float32)
    out_ref[0] = out.astype(out_ref.dtype)
    if attn_refs:
        attn_refs[0][0] = attn.astype(attn_refs[0].dtype)


# ------------------------------ tiling helpers ------------------------------ #


def _vmem_capacity_bytes():
    """Per-core VMEM capacity; conservative 64 MiB fallback (v7x-safe)."""
    cap = 64 * 1024 * 1024
    try:
        cap = int(getattr(pltpu.get_tpu_info(), "vmem_capacity_bytes", cap))
    except Exception:
        pass
    return cap


def _pick_proj_tiles(m, e, budget, cd_bytes, qkv_bytes):
    """(tm, tk) for phase 1 such that double-buffered blocks fit the budget."""
    def fits(tm, tk):
        w = 2 * tk * 3 * e * cd_bytes          # weight block (double-buffered)
        xb = 2 * tm * tk * cd_bytes            # x block
        ob = 2 * 3 * tm * e * qkv_bytes        # q/k/v output blocks
        acc = tm * 3 * e * 4                   # f32 accumulator scratch
        return w + xb + ob + acc <= budget

    tk_opts = [e] + [c for c in (512, 256, 128) if c < e and e % c == 0]
    tm_opts = [c for c in (512, 256, 128) if c <= m] or [m]
    for tk in tk_opts:                          # prefer no K-tiling if it fits
        for tm in tm_opts:                      # prefer the biggest M-tile
            if fits(tm, tk):
                return tm, tk
    return tm_opts[-1], tk_opts[-1]


def _pick_query_tile(s, e, budget, cd_bytes, attn_bytes, out_bytes, want_attn):
    """Largest query tile whose per-step working set fits the VMEM budget."""
    if s <= 8:
        return s
    fixed = 2 * 2 * s * e * cd_bytes            # double-buffered K and V
    def fits(tq):
        per = 2 * tq * e * cd_bytes             # Q block
        per += 2 * tq * e * out_bytes           # out block
        if want_attn:
            per += 2 * tq * s * attn_bytes      # attn-weights block
        per += 3 * tq * s * 4                   # f32 scores/exp intermediates
        return fixed + per <= budget
    for tq in (512, 256, 128, 64, 32, 16, 8):
        if tq <= s and fits(tq):
            return tq
    return 8
    # TODO(synk): for very long S on v7x, add a kv-tile grid axis with
    # flash-style online-softmax accumulators so K/V need not be fully
    # resident (only matters when the (S,E) K/V blocks themselves overflow).


# ------------------------------ wrapper ------------------------------------ #


def self_attention(x, wq, bq, wk, bk, wv, bv, *,
                   compute_dtype=jnp.bfloat16, attn_dtype=None,
                   return_attn_weights=True):
    """x: (B, S, E). Weights: (E, E) PyTorch (out, in). Biases: (E,).

    Returns (out, attn_weights) of shapes (B, S, E) / (B, S, S) like the
    PyTorch module (dropout identity in eval mode), or just `out` when
    return_attn_weights=False (skips the O(S^2) HBM write).
    """
    B, S, E = x.shape
    M = B * S
    out_dtype = x.dtype
    attn_dtype = compute_dtype if attn_dtype is None else attn_dtype
    scale = float(E) ** 0.5

    cd_bytes = jnp.dtype(compute_dtype).itemsize
    out_bytes = jnp.dtype(out_dtype).itemsize
    attn_bytes = jnp.dtype(attn_dtype).itemsize

    vmem_cap = _vmem_capacity_bytes()
    budget = int(vmem_cap * 0.75)               # tile-selection budget
    vmem_limit = int(vmem_cap * 0.90)           # scoped VMEM limit for Mosaic

    # Host-side prep: nn.Linear computes x @ W^T + b.  Fuse the three weights
    # into one (E, 3E) pre-transposed matrix, fold 1/sqrt(E) into the Q slice,
    # and cast weights + x to compute_dtype once (halves VMEM residency and
    # HBM->VMEM DMA bytes vs per-tile in-kernel casts).
    w3 = jnp.concatenate([wq.T / scale, wk.T, wv.T], axis=1).astype(compute_dtype)
    b3 = jnp.concatenate([bq / scale, bk, bv]).reshape(1, 3 * E).astype(jnp.float32)
    x2d = x.reshape(M, E).astype(compute_dtype)

    # ---------------- phase 1: fused Q/K/V projection -----------------------
    tm, tk = _pick_proj_tiles(M, E, budget, cd_bytes, cd_bytes)

    proj_kernel = functools.partial(_qkv_projection_kernel, embed_dim=E)
    qkv_shape = jax.ShapeDtypeStruct((M, E), compute_dtype)
    q2d, k2d, v2d = pl.pallas_call(
        proj_kernel,
        out_shape=(qkv_shape, qkv_shape, qkv_shape),
        grid_spec=pltpu.PrefetchScalarGridSpec(
            num_scalar_prefetch=0,
            grid=(pl.cdiv(M, tm), pl.cdiv(E, tk)),
            in_specs=[
                pl.BlockSpec((tm, tk), lambda m, k: (m, k)),       # x tile
                pl.BlockSpec((tk, 3 * E), lambda m, k: (k, 0)),    # fused W
                pl.BlockSpec((1, 3 * E), lambda m, k: (0, 0)),     # fused bias
            ],
            out_specs=[pl.BlockSpec((tm, E), lambda m, k: (m, 0))] * 3,
            scratch_shapes=[pltpu.VMEM((tm, 3 * E), jnp.float32)],
        ),
        compiler_params=pltpu.CompilerParams(
            dimension_semantics=("parallel", "arbitrary"),
            vmem_limit_bytes=vmem_limit),
    )(x2d, w3, b3)

    q = q2d.reshape(B, S, E)
    k = k2d.reshape(B, S, E)
    v = v2d.reshape(B, S, E)

    # ---------------- phase 2: scores -> softmax -> attn @ V ----------------
    tq = _pick_query_tile(S, E, budget, cd_bytes, attn_bytes, out_bytes,
                          return_attn_weights)

    attn_kernel = functools.partial(_attention_kernel,
                                    compute_dtype=compute_dtype)
    out_block = pl.BlockSpec((1, tq, E), lambda b, i: (b, i, 0))
    if return_attn_weights:
        out_shape = (jax.ShapeDtypeStruct((B, S, E), out_dtype),
                     jax.ShapeDtypeStruct((B, S, S), attn_dtype))
        out_specs = [out_block, pl.BlockSpec((1, tq, S), lambda b, i: (b, i, 0))]
    else:
        out_shape = jax.ShapeDtypeStruct((B, S, E), out_dtype)
        out_specs = out_block

    result = pl.pallas_call(
        attn_kernel,
        out_shape=out_shape,
        grid_spec=pltpu.PrefetchScalarGridSpec(
            num_scalar_prefetch=0,
            grid=(B, pl.cdiv(S, tq)),                    # batch axis first
            in_specs=[
                pl.BlockSpec((1, tq, E), lambda b, i: (b, i, 0)),  # Q tile
                pl.BlockSpec((1, S, E), lambda b, i: (b, 0, 0)),   # full K
                pl.BlockSpec((1, S, E), lambda b, i: (b, 0, 0)),   # full V
            ],
            out_specs=out_specs,
        ),
        compiler_params=pltpu.CompilerParams(
            dimension_semantics=("parallel", "parallel"),
            vmem_limit_bytes=vmem_limit),
    )(q, k, v)

    if return_attn_weights:
        out, attn = result
        return out, attn
    return result


# ------------------------------ reference ---------------------------------- #


def _reference(x, wq, bq, wk, bk, wv, bv):
    E = x.shape[-1]
    scale = jnp.sqrt(jnp.float32(E))
    q = jnp.einsum("bse,oe->bso", x, wq) + bq
    k = jnp.einsum("bse,oe->bso", x, wk) + bk
    v = jnp.einsum("bse,oe->bso", x, wv) + bv
    scores = jnp.einsum("bqe,bke->bqk", q, k) / scale
    attn = jax.nn.softmax(scores, axis=-1)
    out = jnp.einsum("bqk,bke->bqe", attn, v)
    return out, attn


if __name__ == "__main__":
    B, S, E = 2, 8, 32   # batch, seq, embed_dim

    key = jax.random.PRNGKey(0)
    kx, kq, kbq, kk, kbk, kv, kbv = jax.random.split(key, 7)

    x = jax.random.normal(kx, (B, S, E), dtype=jnp.float32)

    # Deterministic parameter init (PyTorch nn.Linear-like uniform range).
    lim = 1.0 / (E ** 0.5)
    wq = jax.random.uniform(kq, (E, E), jnp.float32, -lim, lim)
    bq = jax.random.uniform(kbq, (E,), jnp.float32, -lim, lim)
    wk = jax.random.uniform(kk, (E, E), jnp.float32, -lim, lim)
    bk = jax.random.uniform(kbk, (E,), jnp.float32, -lim, lim)
    wv = jax.random.uniform(kv, (E, E), jnp.float32, -lim, lim)
    bv = jax.random.uniform(kbv, (E,), jnp.float32, -lim, lim)

    ref_out, ref_attn = _reference(x, wq, bq, wk, bk, wv, bv)

    # f32 MXU-operand path (tight check; approx reciprocal in softmax).
    out32, attn32 = self_attention(x, wq, bq, wk, bk, wv, bv,
                                   compute_dtype=jnp.float32)
    jax.block_until_ready((out32, attn32))
    assert jnp.allclose(out32, ref_out, atol=1e-2, rtol=1e-2)
    assert jnp.allclose(attn32, ref_attn, atol=1e-2, rtol=1e-2)

    # bf16 MXU-operand path (f32 accumulation, bf16 attn weights) — the
    # production fast path on v5e/v6e/v7x.
    out16, attn16 = self_attention(x, wq, bq, wk, bk, wv, bv,
                                   compute_dtype=jnp.bfloat16)
    jax.block_until_ready((out16, attn16))
    assert jnp.allclose(out16.astype(jnp.float32), ref_out, atol=5e-2, rtol=5e-2)
    assert jnp.allclose(attn16.astype(jnp.float32), ref_attn, atol=5e-2, rtol=5e-2)

    # attn-weights-free path (skips the O(B*S^2) HBM write entirely).
    out_only = self_attention(x, wq, bq, wk, bk, wv, bv,
                              compute_dtype=jnp.bfloat16,
                              return_attn_weights=False)
    jax.block_until_ready(out_only)
    assert jnp.allclose(out_only.astype(jnp.float32), ref_out,
                        atol=5e-2, rtol=5e-2)

    print("KERNEL_OK")
</pallas_src>

<mosaic_0001>
module attributes {stable_mosaic.version = 11 : i64} {
  func.func @_qkv_projection_kernel(%arg0: i32, %arg1: i32, %arg2: memref<16x32xf32, #tpu.memory_space<vmem>>, %arg3: memref<32x96xf32, #tpu.memory_space<vmem>>, %arg4: memref<1x96xf32, #tpu.memory_space<vmem>>, %arg5: memref<16x32xf32, #tpu.memory_space<vmem>>, %arg6: memref<16x32xf32, #tpu.memory_space<vmem>>, %arg7: memref<16x32xf32, #tpu.memory_space<vmem>>, %arg8: memref<16x96xf32, #tpu.memory_space<vmem>>) attributes {dimension_semantics = [#tpu.dimension_semantics<parallel>, #tpu.dimension_semantics<arbitrary>], iteration_bounds = array<i64: 1, 1>, scalar_prefetch = 0 : i64, scratch_operands = 1 : i64, tpu.core_type = #tpu.core_type<tc>, window_params = [{transform_indices = @transform_0, window_bounds = array<i64: 16, 32>}, {transform_indices = @transform_1, window_bounds = array<i64: 32, 96>}, {pipeline_mode = #tpu.pipeline_mode<synchronous>, transform_indices = @transform_2, window_bounds = array<i64: 1, 96>}, {transform_indices = @transform_3, window_bounds = array<i64: 16, 32>}, {transform_indices = @transform_4, window_bounds = array<i64: 16, 32>}, {transform_indices = @transform_5, window_bounds = array<i64: 16, 32>}]} {
    %c0_i32 = arith.constant 0 : i32
    %0 = arith.cmpi eq, %arg1, %c0_i32 : i32
    %1 = arith.extui %0 : i1 to i32
    %c0_i32_0 = arith.constant 0 : i32
    %2 = arith.cmpi ne, %1, %c0_i32_0 : i32
    scf.if %2 {
      %cst_10 = arith.constant 0.000000e+00 : f32
      %12 = vector.broadcast %cst_10 : f32 to vector<16x96xf32>
      %c0_11 = arith.constant 0 : index
      %c0_12 = arith.constant 0 : index
      %13 = vector.load %arg8[%c0_11, %c0_12] : memref<16x96xf32, #tpu.memory_space<vmem>>, vector<16x96xf32>
      tpu.vector_store %arg8[%c0_11, %c0_12], %12 {strides = array<i32>} : memref<16x96xf32, #tpu.memory_space<vmem>>, vector<16x96xf32>,
    } else {
    }
    %c0 = arith.constant 0 : index
    %c0_1 = arith.constant 0 : index
    %3 = vector.load %arg8[%c0, %c0_1] : memref<16x96xf32, #tpu.memory_space<vmem>>, vector<16x96xf32>
    %c0_2 = arith.constant 0 : index
    %c0_3 = arith.constant 0 : index
    %4 = vector.load %arg2[%c0_2, %c0_3] : memref<16x32xf32, #tpu.memory_space<vmem>>, vector<16x32xf32>
    %c0_4 = arith.constant 0 : index
    %c0_5 = arith.constant 0 : index
    %5 = vector.load %arg3[%c0_4, %c0_5] : memref<32x96xf32, #tpu.memory_space<vmem>>, vector<32x96xf32>
    %cst = arith.constant dense<0.000000e+00> : vector<16x96xf32>
    %6 = tpu.matmul %4, %5, %cst {dimension_numbers = #tpu.dot_dimension_numbers<[1], [0], [0], [1], [0, 0, 1, 1], [], []>} : vector<16x32xf32>, vector<32x96xf32>, vector<16x96xf32> -> vector<16x96xf32>
    %7 = arith.addf %3, %6 : vector<16x96xf32>
    %c0_6 = arith.constant 0 : index
    %c0_7 = arith.constant 0 : index
    %8 = vector.load %arg8[%c0_6, %c0_7] : memref<16x96xf32, #tpu.memory_space<vmem>>, vector<16x96xf32>
    tpu.vector_store %arg8[%c0_6, %c0_7], %7 {strides = array<i32>} : memref<16x96xf32, #tpu.memory_space<vmem>>, vector<16x96xf32>,
    %c0_i32_8 = arith.constant 0 : i32
    %9 = arith.cmpi eq, %arg1, %c0_i32_8 : i32
    %10 = arith.extui %9 : i1 to i32
    %c0_i32_9 = arith.constant 0 : i32
    %11 = arith.cmpi ne, %10, %c0_i32_9 : i32
    scf.if %11 {
      %c0_10 = arith.constant 0 : index
      %c0_11 = arith.constant 0 : index
      %12 = vector.load %arg8[%c0_10, %c0_11] : memref<16x96xf32, #tpu.memory_space<vmem>>, vector<16x96xf32>
      %c0_12 = arith.constant 0 : index
      %c0_13 = arith.constant 0 : index
      %13 = vector.load %arg4[%c0_12, %c0_13] : memref<1x96xf32, #tpu.memory_space<vmem>>, vector<1x96xf32>
      %14 = vector.broadcast %13 : vector<1x96xf32> to vector<16x96xf32>
      %15 = arith.addf %12, %14 : vector<16x96xf32>
      %16 = vector.extract_strided_slice %15 {offsets = [0, 0], sizes = [16, 32], strides = [1, 1]} : vector<16x96xf32> to vector<16x32xf32>
      %c0_14 = arith.constant 0 : index
      %c0_15 = arith.constant 0 : index
      %17 = vector.load %arg5[%c0_14, %c0_15] : memref<16x32xf32, #tpu.memory_space<vmem>>, vector<16x32xf32>
      tpu.vector_store %arg5[%c0_14, %c0_15], %16 {strides = array<i32>} : memref<16x32xf32, #tpu.memory_space<vmem>>, vector<16x32xf32>,
      %18 = vector.extract_strided_slice %15 {offsets = [0, 32], sizes = [16, 32], strides = [1, 1]} : vector<16x96xf32> to vector<16x32xf32>
      %c0_16 = arith.constant 0 : index
      %c0_17 = arith.constant 0 : index
      %19 = vector.load %arg6[%c0_16, %c0_17] : memref<16x32xf32, #tpu.memory_space<vmem>>, vector<16x32xf32>
      tpu.vector_store %arg6[%c0_16, %c0_17], %18 {strides = array<i32>} : memref<16x32xf32, #tpu.memory_space<vmem>>, vector<16x32xf32>,
      %20 = vector.extract_strided_slice %15 {offsets = [0, 64], sizes = [16, 32], strides = [1, 1]} : vector<16x96xf32> to vector<16x32xf32>
      %c0_18 = arith.constant 0 : index
      %c0_19 = arith.constant 0 : index
      %21 = vector.load %arg7[%c0_18, %c0_19] : memref<16x32xf32, #tpu.memory_space<vmem>>, vector<16x32xf32>
      tpu.vector_store %arg7[%c0_18, %c0_19], %20 {strides = array<i32>} : memref<16x32xf32, #tpu.memory_space<vmem>>, vector<16x32xf32>,
    } else {
    }
    return
  }
  func.func @transform_0(%arg0: i32, %arg1: i32) -> (i32, i32) {
    %c0_i32 = arith.constant 0 : i32
    return %arg0, %arg1 : i32, i32
  }
  func.func @transform_1(%arg0: i32, %arg1: i32) -> (i32, i32) {
    %c0_i32 = arith.constant 0 : i32
    %c0_i32_0 = arith.constant 0 : i32
    return %arg1, %c0_i32 : i32, i32
  }
  func.func @transform_2(%arg0: i32, %arg1: i32) -> (i32, i32) {
    %c0_i32 = arith.constant 0 : i32
    %c0_i32_0 = arith.constant 0 : i32
    %c0_i32_1 = arith.constant 0 : i32
    return %c0_i32, %c0_i32_0 : i32, i32
  }
  func.func @transform_3(%arg0: i32, %arg1: i32) -> (i32, i32) {
    %c0_i32 = arith.constant 0 : i32
    %c0_i32_0 = arith.constant 0 : i32
    return %arg0, %c0_i32 : i32, i32
  }
  func.func @transform_4(%arg0: i32, %arg1: i32) -> (i32, i32) {
    %c0_i32 = arith.constant 0 : i32
    %c0_i32_0 = arith.constant 0 : i32
    return %arg0, %c0_i32 : i32, i32
  }
  func.func @transform_5(%arg0: i32, %arg1: i32) -> (i32, i32) {
    %c0_i32 = arith.constant 0 : i32
    %c0_i32_0 = arith.constant 0 : i32
    return %arg0, %c0_i32 : i32, i32
  }
}

</mosaic_0001>

<llo_original>
// kernel: tpu_custom_call.1
$region0: #{tpu_custom_call.1}
  #allocation0 [shape = 'u32[]', space=smem, size = 0x4, offset = 0x4, fixed_abs, tag = 'smem constant byte address 0x4 - core index']
  #allocation1 [shape = 'u32[144,128]{1,0:T(1,128)}', space=vmem, size = 0x12000, scoped, tag = 'internal scratch']
  #allocation2 [shape = 'f32[16,96]{1,0:T(8,128)}', space=vmem, size = 0x2000, scoped, tag = 'scratch operand']
  %s0 = inlined_call_operand.hbm [shape: f32[16,32], index: 0, kind: input, shape index: {}]
  %s1 = inlined_call_operand.hbm [shape: f32[32,96], index: 1, kind: input, shape index: {}]
  %s2 = inlined_call_operand.vmem [shape: f32[1,96], index: 2, kind: input, shape index: {}]
  %s3 = inlined_call_operand.hbm [shape: f32[16,32], index: 3, kind: output, shape index: {0}]
  %s4 = inlined_call_operand.hbm [shape: f32[16,32], index: 4, kind: output, shape index: {1}]
  %s5 = inlined_call_operand.hbm [shape: f32[16,32], index: 5, kind: output, shape index: {2}]
  %6 = xla_tuple %s3, %s4, %s5
  %s7 = sld [smem:[#allocation0]]
  $region54: #{tpu_custom_call.1} parent=0
    _
  %s9 = ssub.s32 1, %s7
  %s10 = scalar_select 0, %s9, %s7
  $region1: #{tpu_custom_call.1} parent=0
    #allocation3 [shape = 'u8[8192]{0}', space=vmem, size = 0x2000, scoped, tag = 'input window, operand 0, single buffered']
    #allocation4 [shape = 's32[1]{0}', space=sflag, size = 0x4, scoped, tag = 'scoped memory for tpu_custom_call.1']
    #allocation5 [shape = 's32[1]{0}', space=sflag, size = 0x4, scoped, tag = 'scoped memory for tpu_custom_call.1']
    #allocation6 [shape = 'u8[16384]{0}', space=vmem, size = 0x4000, scoped, tag = 'input window, operand 1, single buffered']
    #allocation7 [shape = 's32[1]{0}', space=sflag, size = 0x4, scoped, tag = 'scoped memory for tpu_custom_call.1']
    #allocation8 [shape = 'u8[8192]{0}', space=vmem, size = 0x2000, scoped, tag = 'output window, operand 0, single buffered']
    #allocation9 [shape = 'u8[8192]{0}', space=vmem, size = 0x2000, scoped, tag = 'output window, operand 1, single buffered']
    #allocation10 [shape = 's32[1]{0}', space=sflag, size = 0x4, scoped, tag = 'scoped memory for tpu_custom_call.1']
    #allocation11 [shape = 'u8[8192]{0}', space=vmem, size = 0x2000, scoped, tag = 'output window, operand 2, single buffered']
    %11 = vsyncpa [#allocation4], 0
    %12 = vsyncpa [#allocation7], 0
    %13 = vsyncpa [#allocation5], 0
    %14 = vsyncpa [#allocation10], 0
    // Predicated region
    $region2: #{tpu_custom_call.1} parent=1 // pred_check
      _
    $region3: #{tpu_custom_call.1} parent=1 // pred_check_branch
      %16 = sbr.rel (0) target = $region5
    $region4: #{tpu_custom_call.1} parent=1 // pred_region
      %s18 = ssub.s32 256, 256
      %19 = vsyncadd [#allocation4], %s18
      %s20 = sshll.u32 [#allocation3], 4
      %s21 = int_to_ptr.vmem [resolvable:$true] %s20
      %26 = dma.hbm_to_vmem [thread:$0]  %s0, 256, %s21, [#allocation4], 128, 128, 8
    $region5: #{tpu_custom_call.1} parent=1 // pred_fallthru
      _
    // Predicated region
    $region6: #{tpu_custom_call.1} parent=1 // pred_check
      _
    $region7: #{tpu_custom_call.1} parent=1 // pred_check_branch
      %28 = sbr.rel (0) target = $region9
    $region8: #{tpu_custom_call.1} parent=1 // pred_region
      %s30 = ssub.s32 512, 512
      %31 = vsyncadd [#allocation7], %s30
      %s32 = sshll.u32 [#allocation6], 4
      %s33 = int_to_ptr.vmem [resolvable:$true] %s32
      %38 = dma.hbm_to_vmem [thread:$0]  %s1, 512, %s33, [#allocation7], 128, 128, 8
    $region9: #{tpu_custom_call.1} parent=1 // pred_fallthru
      _
    // Predicated region
    $region10: #{tpu_custom_call.1} parent=1 // pred_check
      _
    $region11: #{tpu_custom_call.1} parent=1 // pred_check_branch
      %40 = sbr.rel (0) target = $region13
    $region12: #{tpu_custom_call.1} parent=1 // pred_region
      _
    $region13: #{tpu_custom_call.1} parent=1 // pred_fallthru
      _
    // Predicated region
    $region14: #{tpu_custom_call.1} parent=1 // pred_check
      _
    $region15: #{tpu_custom_call.1} parent=1 // pred_check_branch
      %42 = sbr.rel (0) target = $region17
    $region16: #{tpu_custom_call.1} parent=1 // pred_region
      %43 = dma.done [#allocation4], 256
    $region17: #{tpu_custom_call.1} parent=1 // pred_fallthru
      _
    // Predicated region
    $region18: #{tpu_custom_call.1} parent=1 // pred_check
      _
    $region19: #{tpu_custom_call.1} parent=1 // pred_check_branch
      %45 = sbr.rel (0) target = $region21
    $region20: #{tpu_custom_call.1} parent=1 // pred_region
      %46 = dma.done [#allocation7], 512
    $region21: #{tpu_custom_call.1} parent=1 // pred_fallthru
      _
    %p47 = scmp.eq.s32.totalorder 0, 0
    // Predicated region
    $region22: #{tpu_custom_call.1} parent=1 // pred_check
      %p48 = pneg %p47
    $region23: #{tpu_custom_call.1} parent=1 // pred_check_branch
      %50 = sbr.rel (%p48) target = $region25
    $region24: #{tpu_custom_call.1} parent=1 // pred_region
      %vm51 = vcmask 785408
      %52 = vst.msk [vmem:[#allocation2] sm:$0xff] %vm51, 0.0
      %53 = vst.msk [vmem:[#allocation2 + $0x8] sm:$0xff] %vm51, 0.0
    $region25: #{tpu_custom_call.1} parent=1 // pred_fallthru
      _
    %v54 = vld [vmem:[#allocation2] sm:$0xff]
    %v55 = vld [vmem:[#allocation2 + $0x8] sm:$0xff]
    %v56 = vld [vmem:[#allocation3] sm:$0xff]
    %v57 = vld [vmem:[#allocation3 + $0x8] sm:$0xff]
    %v58 = vld [vmem:[#allocation6] sm:$0xff]
    %v59 = vld [vmem:[#allocation6 + $0x8] sm:$0xff]
    %v60 = vld [vmem:[#allocation6 + $0x10] sm:$0xff]
    %v61 = vld [vmem:[#allocation6 + $0x18] sm:$0xff]
    %vm62 = vcmask 261120
    %v64 = vsel %vm62, %v56, 0
    %v67 = vsel %vm62, %v57, 0
    %69 = vmatprep.subr.mxu0 0.0
    %70 = vmatpush1.msra.mxu0 %v58
    %71 = vmatprep.subr.mxu0 0.0
    %72 = vmatpush1.msra.mxu0 %v59
    %73 = vmatprep.subr.mxu0 0.0
    %74 = vmatpush1.msra.mxu0 %v60
    %75 = vmatprep.subr.mxu0 0.0
    %76 = vmatpush1.msra.mxu0 %v61
    %77 = vmatprep.subr.mxu0 0.0
    %78 = vmatpush1.msra.mxu0 0.0
    %79 = vmatprep.subr.mxu0 0.0
    %80 = vmatpush1.msra.mxu0 0.0
    %81 = vmatprep.subr.mxu0 0.0
    %82 = vmatpush1.msra.mxu0 0.0
    %83 = vmatprep.subr.mxu0 0.0
    %84 = vmatpush1.msra.mxu0 0.0
    %85 = vmatprep.subr.mxu0 0.0
    %86 = vmatpush1.msra.mxu0 0.0
    %87 = vmatprep.subr.mxu0 0.0
    %88 = vmatpush1.msra.mxu0 0.0
    %89 = vmatprep.subr.mxu0 0.0
    %90 = vmatpush1.msra.mxu0 0.0
    %91 = vmatprep.subr.mxu0 0.0
    %92 = vmatpush1.msra.mxu0 0.0
    %93 = vmatprep.subr.mxu0 0.0
    %94 = vmatpush1.msra.mxu0 0.0
    %95 = vmatprep.subr.mxu0 0.0
    %96 = vmatpush1.msra.mxu0 0.0
    %97 = vmatprep.subr.mxu0 0.0
    %98 = vmatpush1.msra.mxu0 0.0
    %99 = vmatprep.subr.mxu0 0.0
    %100 = vmatpush1.msra.mxu0 0.0
    %101 = vmatprep.subr.mxu0 0.0
    %102 = vmatpush1.msra.mxu0 0.0
    %103 = vmatprep.subr.mxu0 0.0
    %104 = vmatpush1.msra.mxu0 0.0
    %105 = vmatprep.subr.mxu0 0.0
    %106 = vmatpush1.msra.mxu0 0.0
    %107 = vmatprep.subr.mxu0 0.0
    %108 = vmatpush1.msra.mxu0 0.0
    %109 = vmatprep.subr.mxu0 0.0
    %110 = vmatpush1.msra.mxu0 0.0
    %111 = vmatprep.subr.mxu0 0.0
    %112 = vmatpush1.msra.mxu0 0.0
    %113 = vmatprep.subr.mxu0 0.0
    %114 = vmatpush1.msra.mxu0 0.0
    %115 = vmatprep.subr.mxu0 0.0
    %116 = vmatpush1.msra.mxu0 0.0
    %117 = vmatprep.subr.mxu0 0.0
    %118 = vmatpush1.msra.mxu0 0.0
    %119 = vmatprep.subr.mxu0 0.0
    %120 = vmatpush1.msra.mxu0 0.0
    %121 = vmatprep.subr.mxu0 0.0
    %122 = vmatpush1.msra.mxu0 0.0
    %123 = vmatprep.subr.mxu0 0.0
    %124 = vmatpush1.msra.mxu0 0.0
    %125 = vmatprep.subr.mxu0 0.0
    %126 = vmatpush1.msra.mxu0 0.0
    %127 = vmatprep.subr.mxu0 0.0
    %128 = vmatpush1.msra.mxu0 0.0
    %129 = vmatprep.subr.mxu0 0.0
    %130 = vmatpush1.msra.mxu0 0.0
    %131 = vmatprep.subr.mxu0 0.0
    %132 = vmatpush1.msra.mxu0 0.0
    %133 = vmatprep.mubr.f32.mxu0 0.0
    %134 = vmatmul.mubr.f32.gmra.mrb[0].mxu0 %v64
    %v135 = vpop.f32.mrb[0].mxu0
    %v136 = vadd.f32 0.0, %v135
    %v137 = vpop.f32.mrb[0].mxu0
    %138 = vmatprep.mubr.f32.mxu0 0.0
    %139 = vmatmul.mubr.f32.gmra.mrb[0].mxu0 %v67
    %v140 = vpop.f32.mrb[0].mxu0
    %v141 = vadd.f32 0.0, %v140
    %v142 = vpop.f32.mrb[0].mxu0
    %143 = vdwg.mxu0
    %v144 = vadd.f32 %v54, %v136
    %v145 = vadd.f32 %v55, %v141
    %vm146 = vcmask 785408
    %147 = vst.msk [vmem:[#allocation2] sm:$0xff] %vm146, %v144
    %148 = vst.msk [vmem:[#allocation2 + $0x8] sm:$0xff] %vm146, %v145
    // Predicated region
    $region26: #{tpu_custom_call.1} parent=1 // pred_check
      %p149 = pneg %p47
    $region27: #{tpu_custom_call.1} parent=1 // pred_check_branch
      %151 = sbr.rel (%p149) target = $region29
    $region28: #{tpu_custom_call.1} parent=1 // pred_region
      %v152 = vld [vmem:[#allocation2] sm:$0xff]
      %v153 = vld [vmem:[#allocation2 + $0x8] sm:$0xff]
      %v154 = vld [vmem:[%s2] sm:$0x1]
      %v156 = vlaneseq
      %v157 = vshrl.u32 %v156, 7
      %v158 = vsub.s32 0, %v157
      %v159 = vrot.slane %v154, %v158
      %v161 = vadd.f32 %v152, %v159
      %v162 = vadd.f32 %v153, %v159
      %163 = vst.msk [vmem:[#allocation8] sm:$0xff] %vm62, %v161
      %164 = vst.msk [vmem:[#allocation8 + $0x8] sm:$0xff] %vm62, %v162
      %167 = vrot.lane.b32.xlu0 %v161, 96
      %v168 = vpop.permute.xlu0 %167
      %169 = vrot.lane.b32.xlu0 %v162, 96
      %v170 = vpop.permute.xlu0 %169
      %173 = vst.msk [vmem:[#allocation9] sm:$0xff] %vm62, %v168
      %174 = vst.msk [vmem:[#allocation9 + $0x8] sm:$0xff] %vm62, %v170
      %175 = vrot.lane.b32.xlu0 %v161, 64
      %v176 = vpop.permute.xlu0 %175
      %177 = vrot.lane.b32.xlu0 %v162, 64
      %v178 = vpop.permute.xlu0 %177
      %181 = vst.msk [vmem:[#allocation11] sm:$0xff] %vm62, %v176
      %182 = vst.msk [vmem:[#allocation11 + $0x8] sm:$0xff] %vm62, %v178
    $region29: #{tpu_custom_call.1} parent=1 // pred_fallthru
      _
    // Predicated region
    $region30: #{tpu_custom_call.1} parent=1 // pred_check
      _
    $region31: #{tpu_custom_call.1} parent=1 // pred_check_branch
      %184 = sbr.rel (0) target = $region33
    $region32: #{tpu_custom_call.1} parent=1 // pred_region
      %s186 = ssub.s32 256, 256
      %187 = vsyncadd [#allocation5], %s186
      %s188 = sshll.u32 [#allocation8], 4
      %s189 = int_to_ptr.vmem [resolvable:$true] %s188
      %194 = dma.vmem_to_hbm [thread:$0]  %s189, 256, %s3, [#allocation5], 128, 128, 8
    $region33: #{tpu_custom_call.1} parent=1 // pred_fallthru
      _
    // Predicated region
    $region34: #{tpu_custom_call.1} parent=1 // pred_check
      _
    $region35: #{tpu_custom_call.1} parent=1 // pred_check_branch
      %196 = sbr.rel (0) target = $region37
    $region36: #{tpu_custom_call.1} parent=1 // pred_region
      %s198 = ssub.s32 256, 256
      %199 = vsyncadd [#allocation10], %s198
      %s200 = sshll.u32 [#allocation9], 4
      %s201 = int_to_ptr.vmem [resolvable:$true] %s200
      %206 = dma.vmem_to_hbm [thread:$0]  %s201, 256, %s4, [#allocation10], 128, 128, 8
    $region37: #{tpu_custom_call.1} parent=1 // pred_fallthru
      _
    // Predicated region
    $region38: #{tpu_custom_call.1} parent=1 // pred_check
      _
    $region39: #{tpu_custom_call.1} parent=1 // pred_check_branch
      %208 = sbr.rel (0) target = $region41
    $region40: #{tpu_custom_call.1} parent=1 // pred_region
      %s210 = ssub.s32 256, 256
      %211 = vsyncadd [#allocation10], %s210
      %s212 = sshll.u32 [#allocation11], 4
      %s213 = int_to_ptr.vmem [resolvable:$true] %s212
      %218 = dma.vmem_to_hbm [thread:$0]  %s213, 256, %s5, [#allocation10], 128, 128, 8
    $region41: #{tpu_custom_call.1} parent=1 // pred_fallthru
      _
    // Predicated region
    $region42: #{tpu_custom_call.1} parent=1 // pred_check
      _
    $region43: #{tpu_custom_call.1} parent=1 // pred_check_branch
      %220 = sbr.rel (0) target = $region45
    $region44: #{tpu_custom_call.1} parent=1 // pred_region
      %221 = dma.done [#allocation5], 256
    $region45: #{tpu_custom_call.1} parent=1 // pred_fallthru
      _
    // Predicated region
    $region46: #{tpu_custom_call.1} parent=1 // pred_check
      _
    $region47: #{tpu_custom_call.1} parent=1 // pred_check_branch
      %223 = sbr.rel (0) target = $region49
    $region48: #{tpu_custom_call.1} parent=1 // pred_region
      %224 = dma.done [#allocation10], 256
    $region49: #{tpu_custom_call.1} parent=1 // pred_fallthru
      _
    // Predicated region
    $region50: #{tpu_custom_call.1} parent=1 // pred_check
      _
    $region51: #{tpu_custom_call.1} parent=1 // pred_check_branch
      %226 = sbr.rel (0) target = $region53
    $region52: #{tpu_custom_call.1} parent=1 // pred_region
      %227 = dma.done [#allocation10], 256
    $region53: #{tpu_custom_call.1} parent=1 // pred_fallthru
      _
    %228 = vsyncpa [#allocation4], 1
    %229 = vsyncpa [#allocation7], 1
    %230 = vsyncpa [#allocation5], 1
    %231 = vsyncpa [#allocation10], 1

</llo_original>
